<compile_context>
chip_gen: v7x
topology: tpu7x:2x2x1
jax: 0.10.0
libtpu: 0.0.40
codegen_flags: <defaults>
</compile_context>

<pallas_src>
import jax
import jax.numpy as jnp
from jax.experimental import pallas as pl
from jax.experimental.pallas import tpu as pltpu


H_PAD = 128   # padded hidden (MXU K dimension)
TM = 128      # token-tile rows (sublanes)
TN = 128      # vocab-tile columns (lanes)


# ---------------------------------------------------------------------------
# Fused Pallas kernel: teacher + student head in one call.
#   o_m = gelu(x_m @ W1_m + b1_m) @ Wout_m      for m in {teacher, student}
# grid = (token tiles, vocab tiles); hidden activations cached in VMEM scratch.
# ---------------------------------------------------------------------------
def _distill_head_kernel(
        xt_ref, w1t_ref, b1t_ref, wot_ref,      # teacher inputs
        xs_ref, w1s_ref, b1s_ref, wos_ref,      # student inputs
        ot_ref, os_ref,                         # outputs
        ht_ref, hs_ref):                        # VMEM scratch (bf16 activations)
    j = pl.program_id(1)

    # Compute gelu(x @ W1 + b1) once per token tile, reuse for all vocab tiles.
    @pl.when(j == 0)
    def _compute_hidden():
        ht = jnp.dot(xt_ref[...], w1t_ref[...],
                     preferred_element_type=jnp.float32)       # [TM, H_PAD] f32
        ht = jax.nn.gelu(ht + b1t_ref[...])
        ht_ref[...] = ht.astype(ht_ref.dtype)

        hs = jnp.dot(xs_ref[...], w1s_ref[...],
                     preferred_element_type=jnp.float32)
        hs = jax.nn.gelu(hs + b1s_ref[...])
        hs_ref[...] = hs.astype(hs_ref.dtype)

    ot_ref[...] = jnp.dot(ht_ref[...], wot_ref[...],
                          preferred_element_type=jnp.float32)  # [TM, TN]
    os_ref[...] = jnp.dot(hs_ref[...], wos_ref[...],
                          preferred_element_type=jnp.float32)


def _round_up(x, m):
    return -(-x // m) * m


def _pad2(a, rows, cols, dtype=jnp.bfloat16):
    r, c = a.shape
    return jnp.pad(a, ((0, rows - r), (0, cols - c))).astype(dtype)


def _fused_distill_heads(xt, teacher_params, xs, student_params, vocab):
    """xt: [N, Ht] f32 teacher tokens, xs: [N, Hs] f32 student tokens.
    Returns ([N, V] f32 teacher logits, [N, V] f32 student logits)."""
    n = xt.shape[0]
    assert xs.shape[0] == n
    n_pad = _round_up(max(n, TM), TM)
    v_pad = _round_up(vocab, TN)

    w1t, b1t, wot = teacher_params
    w1s, b1s, wos = student_params

    # bf16 MXU operands; zero padding keeps the math exact.
    xt_p = _pad2(xt, n_pad, H_PAD)
    xs_p = _pad2(xs, n_pad, H_PAD)
    w1t_p = _pad2(w1t, H_PAD, H_PAD)
    w1s_p = _pad2(w1s, H_PAD, H_PAD)
    b1t_p = _pad2(b1t, 1, H_PAD, dtype=jnp.float32)
    b1s_p = _pad2(b1s, 1, H_PAD, dtype=jnp.float32)
    wot_p = _pad2(wot, H_PAD, v_pad)
    wos_p = _pad2(wos, H_PAD, v_pad)

    grid = (n_pad // TM, v_pad // TN)

    x_spec = pl.BlockSpec((TM, H_PAD), lambda i, j: (i, 0))
    w1_spec = pl.BlockSpec((H_PAD, H_PAD), lambda i, j: (0, 0))   # VMEM-resident
    b1_spec = pl.BlockSpec((1, H_PAD), lambda i, j: (0, 0))
    wo_spec = pl.BlockSpec((H_PAD, TN), lambda i, j: (0, j))
    o_spec = pl.BlockSpec((TM, TN), lambda i, j: (i, j))          # lane-dense out

    flops = 4 * n_pad * H_PAD * (H_PAD + v_pad)                   # 2 models x 2 dots
    bytes_accessed = (
        2 * 2 * (xt_p.size + w1t_p.size + wot_p.size)             # bf16 ins, 2 models
        + 2 * 4 * b1t_p.size
        + 2 * 4 * n_pad * v_pad)                                  # f32 outputs

    out_t, out_s = pl.pallas_call(
        _distill_head_kernel,
        out_shape=(jax.ShapeDtypeStruct((n_pad, v_pad), jnp.float32),
                   jax.ShapeDtypeStruct((n_pad, v_pad), jnp.float32)),
        grid_spec=pltpu.PrefetchScalarGridSpec(
            num_scalar_prefetch=0,
            grid=grid,
            in_specs=[x_spec, w1_spec, b1_spec, wo_spec,
                      x_spec, w1_spec, b1_spec, wo_spec],
            out_specs=[o_spec, o_spec],
            scratch_shapes=[pltpu.VMEM((TM, H_PAD), jnp.bfloat16),
                            pltpu.VMEM((TM, H_PAD), jnp.bfloat16)]),
        compiler_params=pltpu.CompilerParams(
            dimension_semantics=("parallel", "arbitrary"),
            vmem_limit_bytes=32 * 1024 * 1024),
        cost_estimate=pl.CostEstimate(
            flops=flops,
            transcendentals=2 * n_pad * H_PAD,
            bytes_accessed=bytes_accessed),
    )(xt_p, w1t_p, b1t_p, wot_p, xs_p, w1s_p, b1s_p, wos_p)

    return out_t[:n, :vocab], out_s[:n, :vocab]


# ---------------------------------------------------------------------------
# Tiny concrete "BaseModel" (embedding + gelu-MLP head → vocab logits)
# ---------------------------------------------------------------------------
class TinyModel:
    def __init__(self, key, vocab, hidden):
        k_emb, k_w1, k_b1, k_wo = jax.random.split(key, 4)
        self.vocab = vocab
        self.hidden = hidden
        scale = 1.0 / jnp.sqrt(jnp.float32(hidden))
        self.embedding = jax.random.normal(k_emb, (vocab, hidden), jnp.float32) * scale
        self.w1 = jax.random.normal(k_w1, (hidden, hidden), jnp.float32) * scale
        self.b1 = jax.random.normal(k_b1, (1, hidden), jnp.float32) * 0.02
        self.wout = jax.random.normal(k_wo, (hidden, vocab), jnp.float32) * scale

    def embed(self, input_ids):
        # TODO(synk): the embedding gather stays in glue JAX; fusing it would
        # need PrefetchScalarGridSpec scalar-prefetched ids + a row-gather spec.
        return jnp.take(self.embedding, input_ids.reshape(-1), axis=0)

    def head_params(self):
        return (self.w1, self.b1, self.wout)


# ---------------------------------------------------------------------------
# DistillModel: runs teacher and student, returns both logits.
# ---------------------------------------------------------------------------
class DistillModel:
    def __init__(self, teacher, student):
        self.teacher = teacher
        self.student = student

    def forward(self, teacher_kwargs, student_kwargs):
        t_ids = teacher_kwargs["input_ids"]
        s_ids = student_kwargs["input_ids"]
        xt = self.teacher.embed(t_ids)
        xs = self.student.embed(s_ids)
        # TODO(synk): fused kernel assumes teacher/student see the same number
        # of tokens (standard distillation); otherwise run two separate calls.
        assert xt.shape[0] == xs.shape[0]
        t_flat, s_flat = _fused_distill_heads(
            xt, self.teacher.head_params(),
            xs, self.student.head_params(),
            vocab=self.teacher.vocab)
        bt, st = t_ids.shape
        bs, ss = s_ids.shape
        teacher_logits = t_flat.reshape(bt, st, self.teacher.vocab)
        student_logits = s_flat.reshape(bs, ss, self.student.vocab)
        return (teacher_logits, student_logits)


if __name__ == "__main__":
    key = jax.random.PRNGKey(0)
    k_teacher, k_student, k_ids = jax.random.split(key, 3)

    B, S, V = 2, 8, 128
    H_TEACHER, H_STUDENT = 64, 32

    teacher = TinyModel(k_teacher, vocab=V, hidden=H_TEACHER)
    student = TinyModel(k_student, vocab=V, hidden=H_STUDENT)
    model = DistillModel(teacher, student)

    input_ids = jax.random.randint(k_ids, (B, S), 0, V, dtype=jnp.int32)
    teacher_kwargs = {"input_ids": input_ids}
    student_kwargs = {"input_ids": input_ids}

    t_logits, s_logits = model.forward(teacher_kwargs, student_kwargs)
    jax.block_until_ready((t_logits, s_logits))

    # Reference (pure JAX) with matching bf16 rounding of the MXU operands.
    def ref_fwd(m, ids):
        x = jnp.take(m.embedding, ids.reshape(-1), axis=0)
        xb = x.astype(jnp.bfloat16).astype(jnp.float32)
        w1b = m.w1.astype(jnp.bfloat16).astype(jnp.float32)
        h = jax.nn.gelu(xb @ w1b + m.b1)
        hb = h.astype(jnp.bfloat16).astype(jnp.float32)
        wob = m.wout.astype(jnp.bfloat16).astype(jnp.float32)
        return (hb @ wob).reshape(ids.shape[0], ids.shape[1], m.vocab)

    t_ref = ref_fwd(teacher, input_ids)
    s_ref = ref_fwd(student, input_ids)

    assert t_logits.shape == (B, S, V) and s_logits.shape == (B, S, V)
    assert jnp.allclose(t_logits, t_ref, atol=1e-2, rtol=1e-2)
    assert jnp.allclose(s_logits, s_ref, atol=1e-2, rtol=1e-2)

    print("KERNEL_OK")
</pallas_src>

<mosaic_0001>
module attributes {stable_mosaic.version = 11 : i64} {
  func.func @_distill_head_kernel(%arg0: i32, %arg1: i32, %arg2: memref<128x128xbf16, #tpu.memory_space<vmem>>, %arg3: memref<128x128xbf16, #tpu.memory_space<vmem>>, %arg4: memref<1x128xf32, #tpu.memory_space<vmem>>, %arg5: memref<128x128xbf16, #tpu.memory_space<vmem>>, %arg6: memref<128x128xbf16, #tpu.memory_space<vmem>>, %arg7: memref<128x128xbf16, #tpu.memory_space<vmem>>, %arg8: memref<1x128xf32, #tpu.memory_space<vmem>>, %arg9: memref<128x128xbf16, #tpu.memory_space<vmem>>, %arg10: memref<128x128xf32, #tpu.memory_space<vmem>>, %arg11: memref<128x128xf32, #tpu.memory_space<vmem>>, %arg12: memref<128x128xbf16, #tpu.memory_space<vmem>>, %arg13: memref<128x128xbf16, #tpu.memory_space<vmem>>) attributes {dimension_semantics = [#tpu.dimension_semantics<parallel>, #tpu.dimension_semantics<arbitrary>], iteration_bounds = array<i64: 1, 1>, scalar_prefetch = 0 : i64, scratch_operands = 2 : i64, tpu.core_type = #tpu.core_type<tc>, window_params = [{transform_indices = @transform_0, window_bounds = array<i64: 128, 128>}, {pipeline_mode = #tpu.pipeline_mode<synchronous>, transform_indices = @transform_1, window_bounds = array<i64: 128, 128>}, {pipeline_mode = #tpu.pipeline_mode<synchronous>, transform_indices = @transform_2, window_bounds = array<i64: 1, 128>}, {transform_indices = @transform_3, window_bounds = array<i64: 128, 128>}, {transform_indices = @transform_4, window_bounds = array<i64: 128, 128>}, {pipeline_mode = #tpu.pipeline_mode<synchronous>, transform_indices = @transform_5, window_bounds = array<i64: 128, 128>}, {pipeline_mode = #tpu.pipeline_mode<synchronous>, transform_indices = @transform_6, window_bounds = array<i64: 1, 128>}, {transform_indices = @transform_7, window_bounds = array<i64: 128, 128>}, {transform_indices = @transform_8, window_bounds = array<i64: 128, 128>}, {transform_indices = @transform_9, window_bounds = array<i64: 128, 128>}]} {
    %c0_i32 = arith.constant 0 : i32
    %0 = arith.cmpi eq, %arg1, %c0_i32 : i32
    %1 = arith.extui %0 : i1 to i32
    %c0_i32_0 = arith.constant 0 : i32
    %2 = arith.cmpi ne, %1, %c0_i32_0 : i32
    scf.if %2 {
      %c0_13 = arith.constant 0 : index
      %c0_14 = arith.constant 0 : index
      %11 = vector.load %arg2[%c0_13, %c0_14] : memref<128x128xbf16, #tpu.memory_space<vmem>>, vector<128x128xbf16>
      %c0_15 = arith.constant 0 : index
      %c0_16 = arith.constant 0 : index
      %12 = vector.load %arg3[%c0_15, %c0_16] : memref<128x128xbf16, #tpu.memory_space<vmem>>, vector<128x128xbf16>
      %cst_17 = arith.constant dense<0.000000e+00> : vector<128x128xf32>
      %13 = tpu.matmul %11, %12, %cst_17 {dimension_numbers = #tpu.dot_dimension_numbers<[1], [0], [0], [1], [0, 0, 1, 1], [], []>} : vector<128x128xbf16>, vector<128x128xbf16>, vector<128x128xf32> -> vector<128x128xf32>
      %c0_18 = arith.constant 0 : index
      %c0_19 = arith.constant 0 : index
      %14 = vector.load %arg4[%c0_18, %c0_19] : memref<1x128xf32, #tpu.memory_space<vmem>>, vector<1x128xf32>
      %15 = vector.broadcast %14 : vector<1x128xf32> to vector<128x128xf32>
      %16 = arith.addf %13, %15 : vector<128x128xf32>
      %17 = arith.mulf %16, %16 : vector<128x128xf32>
      %18 = arith.mulf %16, %17 : vector<128x128xf32>
      %cst_20 = arith.constant 4.471500e-02 : f32
      %19 = vector.broadcast %cst_20 : f32 to vector<128x128xf32>
      %20 = arith.mulf %19, %18 : vector<128x128xf32>
      %21 = arith.addf %16, %20 : vector<128x128xf32>
      %cst_21 = arith.constant 0.797884583 : f32
      %22 = vector.broadcast %cst_21 : f32 to vector<128x128xf32>
      %23 = arith.mulf %22, %21 : vector<128x128xf32>
      %24 = math.tanh %23 : vector<128x128xf32>
      %cst_22 = arith.constant 1.000000e+00 : f32
      %25 = vector.broadcast %cst_22 : f32 to vector<128x128xf32>
      %26 = arith.addf %25, %24 : vector<128x128xf32>
      %cst_23 = arith.constant 5.000000e-01 : f32
      %27 = vector.broadcast %cst_23 : f32 to vector<128x128xf32>
      %28 = arith.mulf %27, %26 : vector<128x128xf32>
      %29 = arith.mulf %16, %28 : vector<128x128xf32>
      %30 = arith.truncf %29 : vector<128x128xf32> to vector<128x128xbf16>
      %c0_24 = arith.constant 0 : index
      %c0_25 = arith.constant 0 : index
      %31 = vector.load %arg12[%c0_24, %c0_25] : memref<128x128xbf16, #tpu.memory_space<vmem>>, vector<128x128xbf16>
      tpu.vector_store %arg12[%c0_24, %c0_25], %30 {strides = array<i32>} : memref<128x128xbf16, #tpu.memory_space<vmem>>, vector<128x128xbf16>,
      %c0_26 = arith.constant 0 : index
      %c0_27 = arith.constant 0 : index
      %32 = vector.load %arg6[%c0_26, %c0_27] : memref<128x128xbf16, #tpu.memory_space<vmem>>, vector<128x128xbf16>
      %c0_28 = arith.constant 0 : index
      %c0_29 = arith.constant 0 : index
      %33 = vector.load %arg7[%c0_28, %c0_29] : memref<128x128xbf16, #tpu.memory_space<vmem>>, vector<128x128xbf16>
      %cst_30 = arith.constant dense<0.000000e+00> : vector<128x128xf32>
      %34 = tpu.matmul %32, %33, %cst_30 {dimension_numbers = #tpu.dot_dimension_numbers<[1], [0], [0], [1], [0, 0, 1, 1], [], []>} : vector<128x128xbf16>, vector<128x128xbf16>, vector<128x128xf32> -> vector<128x128xf32>
      %c0_31 = arith.constant 0 : index
      %c0_32 = arith.constant 0 : index
      %35 = vector.load %arg8[%c0_31, %c0_32] : memref<1x128xf32, #tpu.memory_space<vmem>>, vector<1x128xf32>
      %36 = vector.broadcast %35 : vector<1x128xf32> to vector<128x128xf32>
      %37 = arith.addf %34, %36 : vector<128x128xf32>
      %38 = arith.mulf %37, %37 : vector<128x128xf32>
      %39 = arith.mulf %37, %38 : vector<128x128xf32>
      %cst_33 = arith.constant 4.471500e-02 : f32
      %40 = vector.broadcast %cst_33 : f32 to vector<128x128xf32>
      %41 = arith.mulf %40, %39 : vector<128x128xf32>
      %42 = arith.addf %37, %41 : vector<128x128xf32>
      %cst_34 = arith.constant 0.797884583 : f32
      %43 = vector.broadcast %cst_34 : f32 to vector<128x128xf32>
      %44 = arith.mulf %43, %42 : vector<128x128xf32>
      %45 = math.tanh %44 : vector<128x128xf32>
      %cst_35 = arith.constant 1.000000e+00 : f32
      %46 = vector.broadcast %cst_35 : f32 to vector<128x128xf32>
      %47 = arith.addf %46, %45 : vector<128x128xf32>
      %cst_36 = arith.constant 5.000000e-01 : f32
      %48 = vector.broadcast %cst_36 : f32 to vector<128x128xf32>
      %49 = arith.mulf %48, %47 : vector<128x128xf32>
      %50 = arith.mulf %37, %49 : vector<128x128xf32>
      %51 = arith.truncf %50 : vector<128x128xf32> to vector<128x128xbf16>
      %c0_37 = arith.constant 0 : index
      %c0_38 = arith.constant 0 : index
      %52 = vector.load %arg13[%c0_37, %c0_38] : memref<128x128xbf16, #tpu.memory_space<vmem>>, vector<128x128xbf16>
      tpu.vector_store %arg13[%c0_37, %c0_38], %51 {strides = array<i32>} : memref<128x128xbf16, #tpu.memory_space<vmem>>, vector<128x128xbf16>,
    } else {
    }
    %c0 = arith.constant 0 : index
    %c0_1 = arith.constant 0 : index
    %3 = vector.load %arg12[%c0, %c0_1] : memref<128x128xbf16, #tpu.memory_space<vmem>>, vector<128x128xbf16>
    %c0_2 = arith.constant 0 : index
    %c0_3 = arith.constant 0 : index
    %4 = vector.load %arg5[%c0_2, %c0_3] : memref<128x128xbf16, #tpu.memory_space<vmem>>, vector<128x128xbf16>
    %cst = arith.constant dense<0.000000e+00> : vector<128x128xf32>
    %5 = tpu.matmul %3, %4, %cst {dimension_numbers = #tpu.dot_dimension_numbers<[1], [0], [0], [1], [0, 0, 1, 1], [], []>} : vector<128x128xbf16>, vector<128x128xbf16>, vector<128x128xf32> -> vector<128x128xf32>
    %c0_4 = arith.constant 0 : index
    %c0_5 = arith.constant 0 : index
    %6 = vector.load %arg10[%c0_4, %c0_5] : memref<128x128xf32, #tpu.memory_space<vmem>>, vector<128x128xf32>
    tpu.vector_store %arg10[%c0_4, %c0_5], %5 {strides = array<i32>} : memref<128x128xf32, #tpu.memory_space<vmem>>, vector<128x128xf32>,
    %c0_6 = arith.constant 0 : index
    %c0_7 = arith.constant 0 : index
    %7 = vector.load %arg13[%c0_6, %c0_7] : memref<128x128xbf16, #tpu.memory_space<vmem>>, vector<128x128xbf16>
    %c0_8 = arith.constant 0 : index
    %c0_9 = arith.constant 0 : index
    %8 = vector.load %arg9[%c0_8, %c0_9] : memref<128x128xbf16, #tpu.memory_space<vmem>>, vector<128x128xbf16>
    %cst_10 = arith.constant dense<0.000000e+00> : vector<128x128xf32>
    %9 = tpu.matmul %7, %8, %cst_10 {dimension_numbers = #tpu.dot_dimension_numbers<[1], [0], [0], [1], [0, 0, 1, 1], [], []>} : vector<128x128xbf16>, vector<128x128xbf16>, vector<128x128xf32> -> vector<128x128xf32>
    %c0_11 = arith.constant 0 : index
    %c0_12 = arith.constant 0 : index
    %10 = vector.load %arg11[%c0_11, %c0_12] : memref<128x128xf32, #tpu.memory_space<vmem>>, vector<128x128xf32>
    tpu.vector_store %arg11[%c0_11, %c0_12], %9 {strides = array<i32>} : memref<128x128xf32, #tpu.memory_space<vmem>>, vector<128x128xf32>,
    return
  }
  func.func @transform_0(%arg0: i32, %arg1: i32) -> (i32, i32) {
    %c0_i32 = arith.constant 0 : i32
    %c0_i32_0 = arith.constant 0 : i32
    return %arg0, %c0_i32 : i32, i32
  }
  func.func @transform_1(%arg0: i32, %arg1: i32) -> (i32, i32) {
    %c0_i32 = arith.constant 0 : i32
    %c0_i32_0 = arith.constant 0 : i32
    %c0_i32_1 = arith.constant 0 : i32
    return %c0_i32, %c0_i32_0 : i32, i32
  }
  func.func @transform_2(%arg0: i32, %arg1: i32) -> (i32, i32) {
    %c0_i32 = arith.constant 0 : i32
    %c0_i32_0 = arith.constant 0 : i32
    %c0_i32_1 = arith.constant 0 : i32
    return %c0_i32, %c0_i32_0 : i32, i32
  }
  func.func @transform_3(%arg0: i32, %arg1: i32) -> (i32, i32) {
    %c0_i32 = arith.constant 0 : i32
    %c0_i32_0 = arith.constant 0 : i32
    return %c0_i32, %arg1 : i32, i32
  }
  func.func @transform_4(%arg0: i32, %arg1: i32) -> (i32, i32) {
    %c0_i32 = arith.constant 0 : i32
    %c0_i32_0 = arith.constant 0 : i32
    return %arg0, %c0_i32 : i32, i32
  }
  func.func @transform_5(%arg0: i32, %arg1: i32) -> (i32, i32) {
    %c0_i32 = arith.constant 0 : i32
    %c0_i32_0 = arith.constant 0 : i32
    %c0_i32_1 = arith.constant 0 : i32
    return %c0_i32, %c0_i32_0 : i32, i32
  }
  func.func @transform_6(%arg0: i32, %arg1: i32) -> (i32, i32) {
    %c0_i32 = arith.constant 0 : i32
    %c0_i32_0 = arith.constant 0 : i32
    %c0_i32_1 = arith.constant 0 : i32
    return %c0_i32, %c0_i32_0 : i32, i32
  }
  func.func @transform_7(%arg0: i32, %arg1: i32) -> (i32, i32) {
    %c0_i32 = arith.constant 0 : i32
    %c0_i32_0 = arith.constant 0 : i32
    return %c0_i32, %arg1 : i32, i32
  }
  func.func @transform_8(%arg0: i32, %arg1: i32) -> (i32, i32) {
    %c0_i32 = arith.constant 0 : i32
    return %arg0, %arg1 : i32, i32
  }
  func.func @transform_9(%arg0: i32, %arg1: i32) -> (i32, i32) {
    %c0_i32 = arith.constant 0 : i32
    return %arg0, %arg1 : i32, i32
  }
}

</mosaic_0001>

<llo_original>
// kernel: tpu_custom_call.1
$region0: #{tpu_custom_call.1}
  #allocation0 [shape = 'u32[]', space=smem, size = 0x4, offset = 0x4, fixed_abs, tag = 'smem constant byte address 0x4 - core index']
  #allocation1 [shape = 'u32[144,128]{1,0:T(1,128)}', space=vmem, size = 0x12000, scoped, tag = 'internal scratch']
  #allocation2 [shape = 'bf16[128,128]{1,0:T(16,128)(2,1)}', space=vmem, size = 0x8000, scoped, tag = 'scratch operand']
  #allocation3 [shape = 'bf16[128,128]{1,0:T(16,128)(2,1)}', space=vmem, size = 0x8000, scoped, tag = 'scratch operand']
  %s0 = inlined_call_operand.hbm [shape: bf16[128,128], index: 0, kind: input, shape index: {}]
  %s1 = inlined_call_operand.hbm [shape: bf16[128,128], index: 1, kind: input, shape index: {}]
  %s2 = inlined_call_operand.vmem [shape: f32[1,128], index: 2, kind: input, shape index: {}]
  %s3 = inlined_call_operand.hbm [shape: bf16[128,128], index: 3, kind: input, shape index: {}]
  %s4 = inlined_call_operand.hbm [shape: bf16[128,128], index: 4, kind: input, shape index: {}]
  %s5 = inlined_call_operand.hbm [shape: bf16[128,128], index: 5, kind: input, shape index: {}]
  %s6 = inlined_call_operand.vmem [shape: f32[1,128], index: 6, kind: input, shape index: {}]
  %s7 = inlined_call_operand.hbm [shape: bf16[128,128], index: 7, kind: input, shape index: {}]
  %s8 = inlined_call_operand.hbm [shape: f32[128,128], index: 8, kind: output, shape index: {0}]
  %s9 = inlined_call_operand.hbm [shape: f32[128,128], index: 9, kind: output, shape index: {1}]
  %10 = xla_tuple %s8, %s9
  %s11 = sld [smem:[#allocation0]]
  $region78: #{tpu_custom_call.1} parent=0
    _
  %s13 = ssub.s32 1, %s11
  %s14 = scalar_select 0, %s13, %s11
  $region1: #{tpu_custom_call.1} parent=0
    #allocation4 [shape = 'u8[32768]{0}', space=vmem, size = 0x8000, scoped, tag = 'input window, operand 0, single buffered']
    #allocation5 [shape = 's32[1]{0}', space=sflag, size = 0x4, scoped, tag = 'scoped memory for tpu_custom_call.1']
    #allocation6 [shape = 's32[1]{0}', space=sflag, size = 0x4, scoped, tag = 'scoped memory for tpu_custom_call.1']
    #allocation7 [shape = 'u8[32768]{0}', space=vmem, size = 0x8000, scoped, tag = 'input window, operand 1, single buffered']
    #allocation8 [shape = 's32[1]{0}', space=sflag, size = 0x4, scoped, tag = 'scoped memory for tpu_custom_call.1']
    #allocation9 [shape = 'u8[32768]{0}', space=vmem, size = 0x8000, scoped, tag = 'input window, operand 3, single buffered']
    #allocation10 [shape = 'u8[32768]{0}', space=vmem, size = 0x8000, scoped, tag = 'input window, operand 4, single buffered']
    #allocation11 [shape = 's32[1]{0}', space=sflag, size = 0x4, scoped, tag = 'scoped memory for tpu_custom_call.1']
    #allocation12 [shape = 'u8[32768]{0}', space=vmem, size = 0x8000, scoped, tag = 'input window, operand 5, single buffered']
    #allocation13 [shape = 'u8[32768]{0}', space=vmem, size = 0x8000, scoped, tag = 'input window, operand 7, single buffered']
    #allocation14 [shape = 's32[1]{0}', space=sflag, size = 0x4, scoped, tag = 'scoped memory for tpu_custom_call.1']
    #allocation15 [shape = 'u8[65536]{0}', space=vmem, size = 0x10000, scoped, tag = 'output window, operand 0, single buffered']
    #allocation16 [shape = 'u8[65536]{0}', space=vmem, size = 0x10000, scoped, tag = 'output window, operand 1, single buffered']
    #allocation17 [shape = 's32[1]{0}', space=sflag, size = 0x4, scoped, tag = 'scoped memory for tpu_custom_call.1']
    %15 = vsyncpa [#allocation5], 0
    %16 = vsyncpa [#allocation8], 0
    %17 = vsyncpa [#allocation11], 0
    %18 = vsyncpa [#allocation14], 0
    %19 = vsyncpa [#allocation6], 0
    %20 = vsyncpa [#allocation17], 0
    // Predicated region
    $region2: #{tpu_custom_call.1} parent=1 // pred_check
      _
    $region3: #{tpu_custom_call.1} parent=1 // pred_check_branch
      %22 = sbr.rel (0) target = $region5
    $region4: #{tpu_custom_call.1} parent=1 // pred_region
      %s24 = ssub.s32 1024, 1024
      %25 = vsyncadd [#allocation5], %s24
      %s26 = sshll.u32 [#allocation4], 4
      %s27 = int_to_ptr.vmem [resolvable:$true] %s26
      %32 = dma.hbm_to_vmem [thread:$0]  %s0, 1024, %s27, [#allocation5], 64, 64, 4
    $region5: #{tpu_custom_call.1} parent=1 // pred_fallthru
      _
    // Predicated region
    $region6: #{tpu_custom_call.1} parent=1 // pred_check
      _
    $region7: #{tpu_custom_call.1} parent=1 // pred_check_branch
      %34 = sbr.rel (0) target = $region9
    $region8: #{tpu_custom_call.1} parent=1 // pred_region
      %s36 = ssub.s32 1024, 1024
      %37 = vsyncadd [#allocation8], %s36
      %s38 = sshll.u32 [#allocation7], 4
      %s39 = int_to_ptr.vmem [resolvable:$true] %s38
      %44 = dma.hbm_to_vmem [thread:$0]  %s1, 1024, %s39, [#allocation8], 64, 64, 4
    $region9: #{tpu_custom_call.1} parent=1 // pred_fallthru
      _
    // Predicated region
    $region10: #{tpu_custom_call.1} parent=1 // pred_check
      _
    $region11: #{tpu_custom_call.1} parent=1 // pred_check_branch
      %46 = sbr.rel (0) target = $region13
    $region12: #{tpu_custom_call.1} parent=1 // pred_region
      _
    $region13: #{tpu_custom_call.1} parent=1 // pred_fallthru
      _
    // Predicated region
    $region14: #{tpu_custom_call.1} parent=1 // pred_check
      _
    $region15: #{tpu_custom_call.1} parent=1 // pred_check_branch
      %48 = sbr.rel (0) target = $region17
    $region16: #{tpu_custom_call.1} parent=1 // pred_region
      %s50 = ssub.s32 1024, 1024
      %51 = vsyncadd [#allocation8], %s50
      %s52 = sshll.u32 [#allocation9], 4
      %s53 = int_to_ptr.vmem [resolvable:$true] %s52
      %58 = dma.hbm_to_vmem [thread:$0]  %s3, 1024, %s53, [#allocation8], 64, 64, 4
    $region17: #{tpu_custom_call.1} parent=1 // pred_fallthru
      _
    // Predicated region
    $region18: #{tpu_custom_call.1} parent=1 // pred_check
      _
    $region19: #{tpu_custom_call.1} parent=1 // pred_check_branch
      %60 = sbr.rel (0) target = $region21
    $region20: #{tpu_custom_call.1} parent=1 // pred_region
      %s62 = ssub.s32 1024, 1024
      %63 = vsyncadd [#allocation11], %s62
      %s64 = sshll.u32 [#allocation10], 4
      %s65 = int_to_ptr.vmem [resolvable:$true] %s64
      %70 = dma.hbm_to_vmem [thread:$0]  %s4, 1024, %s65, [#allocation11], 64, 64, 4
    $region21: #{tpu_custom_call.1} parent=1 // pred_fallthru
      _
    // Predicated region
    $region22: #{tpu_custom_call.1} parent=1 // pred_check
      _
    $region23: #{tpu_custom_call.1} parent=1 // pred_check_branch
      %72 = sbr.rel (0) target = $region25
    $region24: #{tpu_custom_call.1} parent=1 // pred_region
      %s74 = ssub.s32 1024, 1024
      %75 = vsyncadd [#allocation11], %s74
      %s76 = sshll.u32 [#allocation12], 4
      %s77 = int_to_ptr.vmem [resolvable:$true] %s76
      %82 = dma.hbm_to_vmem [thread:$0]  %s5, 1024, %s77, [#allocation11], 64, 64, 4
    $region25: #{tpu_custom_call.1} parent=1 // pred_fallthru
      _
    // Predicated region
    $region26: #{tpu_custom_call.1} parent=1 // pred_check
      _
    $region27: #{tpu_custom_call.1} parent=1 // pred_check_branch
      %84 = sbr.rel (0) target = $region29
    $region28: #{tpu_custom_call.1} parent=1 // pred_region
      _
    $region29: #{tpu_custom_call.1} parent=1 // pred_fallthru
      _
    // Predicated region
    $region30: #{tpu_custom_call.1} parent=1 // pred_check
      _
    $region31: #{tpu_custom_call.1} parent=1 // pred_check_branch
      %86 = sbr.rel (0) target = $region33
    $region32: #{tpu_custom_call.1} parent=1 // pred_region
      %s88 = ssub.s32 1024, 1024
      %89 = vsyncadd [#allocation14], %s88
      %s90 = sshll.u32 [#allocation13], 4
      %s91 = int_to_ptr.vmem [resolvable:$true] %s90
      %96 = dma.hbm_to_vmem [thread:$0]  %s7, 1024, %s91, [#allocation14], 64, 64, 4
    $region33: #{tpu_custom_call.1} parent=1 // pred_fallthru
      _
    // Predicated region
    $region34: #{tpu_custom_call.1} parent=1 // pred_check
      _
    $region35: #{tpu_custom_call.1} parent=1 // pred_check_branch
      %98 = sbr.rel (0) target = $region37
    $region36: #{tpu_custom_call.1} parent=1 // pred_region
      %99 = dma.done [#allocation5], 1024
    $region37: #{tpu_custom_call.1} parent=1 // pred_fallthru
      _
    // Predicated region
    $region38: #{tpu_custom_call.1} parent=1 // pred_check
      _
    $region39: #{tpu_custom_call.1} parent=1 // pred_check_branch
      %101 = sbr.rel (0) target = $region41
    $region40: #{tpu_custom_call.1} parent=1 // pred_region
      %102 = dma.done [#allocation8], 1024
    $region41: #{tpu_custom_call.1} parent=1 // pred_fallthru
      _
    // Predicated region
    $region42: #{tpu_custom_call.1} parent=1 // pred_check
      _
    $region43: #{tpu_custom_call.1} parent=1 // pred_check_branch
      %104 = sbr.rel (0) target = $region45
    $region44: #{tpu_custom_call.1} parent=1 // pred_region
      %105 = dma.done [#allocation8], 1024
    $region45: #{tpu_custom_call.1} parent=1 // pred_fallthru
      _
    // Predicated region
    $region46: #{tpu_custom_call.1} parent=1 // pred_check
      _
    $region47: #{tpu_custom_call.1} parent=1 // pred_check_branch
      %107 = sbr.rel (0) target = $region49
    $region48: #{tpu_custom_call.1} parent=1 // pred_region
      %108 = dma.done [#allocation11], 1024
    $region49: #{tpu_custom_call.1} parent=1 // pred_fallthru
      _
    // Predicated region
    $region50: #{tpu_custom_call.1} parent=1 // pred_check
      _
    $region51: #{tpu_custom_call.1} parent=1 // pred_check_branch
      %110 = sbr.rel (0) target = $region53
    $region52: #{tpu_custom_call.1} parent=1 // pred_region
      %111 = dma.done [#allocation11], 1024
    $region53: #{tpu_custom_call.1} parent=1 // pred_fallthru
      _
    // Predicated region
    $region54: #{tpu_custom_call.1} parent=1 // pred_check
      _
    $region55: #{tpu_custom_call.1} parent=1 // pred_check_branch
      %113 = sbr.rel (0) target = $region57
    $region56: #{tpu_custom_call.1} parent=1 // pred_region
      %114 = dma.done [#allocation14], 1024
    $region57: #{tpu_custom_call.1} parent=1 // pred_fallthru
      _
    %p116 = scmp.eq.s32.totalorder 0, 0
    // Predicated region
    $region58: #{tpu_custom_call.1} parent=1 // pred_check
      %p117 = pneg %p116
    $region59: #{tpu_custom_call.1} parent=1 // pred_check_branch
      %119 = sbr.rel (%p117) target = $region61
    $region60: #{tpu_custom_call.1} parent=1 // pred_region
      %v120 = vld [vmem:[#allocation4] sm:$0xf]
      %v121 = vld [vmem:[#allocation4 + $0x4] sm:$0xf]
      %v122 = vld [vmem:[#allocation4 + $0x8] sm:$0xf]
      %v123 = vld [vmem:[#allocation4 + $0xc] sm:$0xf]
      %v124 = vld [vmem:[#allocation4 + $0x10] sm:$0xf]
      %v125 = vld [vmem:[#allocation4 + $0x14] sm:$0xf]
      %v126 = vld [vmem:[#allocation4 + $0x18] sm:$0xf]
      %v127 = vld [vmem:[#allocation4 + $0x1c] sm:$0xf]
      %v128 = vld [vmem:[#allocation4 + $0x20] sm:$0xf]
      %v129 = vld [vmem:[#allocation4 + $0x24] sm:$0xf]
      %v130 = vld [vmem:[#allocation4 + $0x28] sm:$0xf]
      %v131 = vld [vmem:[#allocation4 + $0x2c] sm:$0xf]
      %v132 = vld [vmem:[#allocation4 + $0x30] sm:$0xf]
      %v133 = vld [vmem:[#allocation4 + $0x34] sm:$0xf]
      %v134 = vld [vmem:[#allocation4 + $0x38] sm:$0xf]
      %v135 = vld [vmem:[#allocation4 + $0x3c] sm:$0xf]
      %v136 = vld [vmem:[#allocation7] sm:$0xf]
      %v137 = vld [vmem:[#allocation7 + $0x4] sm:$0xf]
      %v138 = vld [vmem:[#allocation7 + $0x8] sm:$0xf]
      %v139 = vld [vmem:[#allocation7 + $0xc] sm:$0xf]
      %v140 = vld [vmem:[#allocation7 + $0x10] sm:$0xf]
      %v141 = vld [vmem:[#allocation7 + $0x14] sm:$0xf]
      %v142 = vld [vmem:[#allocation7 + $0x18] sm:$0xf]
      %v143 = vld [vmem:[#allocation7 + $0x1c] sm:$0xf]
      %v144 = vld [vmem:[#allocation7 + $0x20] sm:$0xf]
      %v145 = vld [vmem:[#allocation7 + $0x24] sm:$0xf]
      %v146 = vld [vmem:[#allocation7 + $0x28] sm:$0xf]
      %v147 = vld [vmem:[#allocation7 + $0x2c] sm:$0xf]
      %v148 = vld [vmem:[#allocation7 + $0x30] sm:$0xf]
      %v149 = vld [vmem:[#allocation7 + $0x34] sm:$0xf]
      %v150 = vld [vmem:[#allocation7 + $0x38] sm:$0xf]
      %v151 = vld [vmem:[#allocation7 + $0x3c] sm:$0xf]
      %v152 = vld [vmem:[%s2] sm:$0x1]
      %v154 = vlaneseq
      %v155 = vshrl.u32 %v154, 7
      %v156 = vsub.s32 0, %v155
      %v157 = vrot.slane %v152, %v156
      %v175 = vunpack.c.l.b16 %v120
      %v176 = vunpack.c.l.b16 %v121
      %v177 = vunpack.c.l.b16 %v122
      %v178 = vunpack.c.l.b16 %v123
      %v179 = vunpack.c.l.b16 %v124
      %v180 = vunpack.c.l.b16 %v125
      %v181 = vunpack.c.l.b16 %v126
      %v182 = vunpack.c.l.b16 %v127
      %v183 = vunpack.c.l.b16 %v128
      %v184 = vunpack.c.l.b16 %v129
      %v185 = vunpack.c.l.b16 %v130
      %v186 = vunpack.c.l.b16 %v131
      %v187 = vunpack.c.l.b16 %v132
      %v188 = vunpack.c.l.b16 %v133
      %v189 = vunpack.c.l.b16 %v134
      %v190 = vunpack.c.l.b16 %v135
      %v191 = vpack.c.b16 %v176, %v175
      %v192 = vpack.c.b16 %v178, %v177
      %v193 = vpack.c.b16 %v180, %v179
      %v194 = vpack.c.b16 %v182, %v181
      %v195 = vpack.c.b16 %v184, %v183
      %v196 = vpack.c.b16 %v186, %v185
      %v197 = vpack.c.b16 %v188, %v187
      %v198 = vpack.c.b16 %v190, %v189
      %v223 = vunpack.c.l.b16 %v136
      %v224 = vunpack.c.l.b16 %v137
      %v225 = vunpack.c.l.b16 %v138
      %v226 = vunpack.c.l.b16 %v139
      %v227 = vunpack.c.l.b16 %v140
      %v228 = vunpack.c.l.b16 %v141
      %v229 = vunpack.c.l.b16 %v142
      %v230 = vunpack.c.l.b16 %v143
      %v231 = vunpack.c.l.b16 %v144
      %v232 = vunpack.c.l.b16 %v145
      %v233 = vunpack.c.l.b16 %v146
      %v234 = vunpack.c.l.b16 %v147
      %v235 = vunpack.c.l.b16 %v148
      %v236 = vunpack.c.l.b16 %v149
      %v237 = vunpack.c.l.b16 %v150
      %v238 = vunpack.c.l.b16 %v151
      %v239 = vpack.c.b16 %v224, %v223
      %v240 = vpack.c.b16 %v226, %v225
      %v241 = vpack.c.b16 %v228, %v227
      %v242 = vpack.c.b16 %v230, %v229
      %v243 = vpack.c.b16 %v232, %v231
      %v244 = vpack.c.b16 %v234, %v233
      %v245 = vpack.c.b16 %v236, %v235
      %v246 = vpack.c.b16 %v238, %v237
      %255 = vmatprep.subr.bf16.mxu0 0
      %256 = vmatpush1.bf16.msra.mxu0 %v239
      %257 = vmatprep.subr.bf16.mxu0 0
      %258 = vmatpush1.bf16.msra.mxu0 %v240
      %259 = vmatprep.subr.bf16.mxu0 0
      %260 = vmatpush1.bf16.msra.mxu0 %v241
      %261 = vmatprep.subr.bf16.mxu0 0
      %262 = vmatpush1.bf16.msra.mxu0 %v242
      %263 = vmatprep.subr.bf16.mxu0 0
      %264 = vmatpush1.bf16.msra.mxu0 %v243
      %265 = vmatprep.subr.bf16.mxu0 0
      %266 = vmatpush1.bf16.msra.mxu0 %v244
      %267 = vmatprep.subr.bf16.mxu0 0
      %268 = vmatpush1.bf16.msra.mxu0 %v245
      %269 = vmatprep.subr.bf16.mxu0 0
      %270 = vmatpush1.bf16.msra.mxu0 %v246
      %271 = vmatprep.subr.bf16.mxu0 0
      %272 = vmatpush1.bf16.msra.mxu0 0
      %273 = vmatprep.subr.bf16.mxu0 0
      %274 = vmatpush1.bf16.msra.mxu0 0
      %275 = vmatprep.subr.bf16.mxu0 0
      %276 = vmatpush1.bf16.msra.mxu0 0
      %277 = vmatprep.subr.bf16.mxu0 0
      %278 = vmatpush1.bf16.msra.mxu0 0
      %279 = vmatprep.subr.bf16.mxu0 0
      %280 = vmatpush1.bf16.msra.mxu0 0
      %281 = vmatprep.subr.bf16.mxu0 0
      %282 = vmatpush1.bf16.msra.mxu0 0
      %283 = vmatprep.subr.bf16.mxu0 0
      %284 = vmatpush1.bf16.msra.mxu0 0
      %285 = vmatprep.subr.bf16.mxu0 0
      %286 = vmatpush1.bf16.msra.mxu0 0
      %287 = vmatprep.mubr.bf16.mxu0 0
      %288 = vmatmul.mubr.bf16.gmra.mrb[0].mxu0 %v191
      %v289 = vpop.f32.mrb[0].mxu0
      %v290 = vadd.f32 %v157, %v289
      %v291 = vpop.f32.mrb[0].mxu0
      %v292 = vpop.f32.mrb[0].mxu0
      %v293 = vadd.f32 %v157, %v292
      %v294 = vpop.f32.mrb[0].mxu0
      %295 = vmatprep.mubr.bf16.mxu0 0
      %296 = vmatmul.mubr.bf16.gmra.mrb[0].mxu0 %v192
      %v297 = vpop.f32.mrb[0].mxu0
      %v298 = vadd.f32 %v157, %v297
      %v299 = vpop.f32.mrb[0].mxu0
      %v300 = vpop.f32.mrb[0].mxu0
      %v301 = vadd.f32 %v157, %v300
      %v302 = vpop.f32.mrb[0].mxu0
      %303 = vmatprep.mubr.bf16.mxu0 0
      %304 = vmatmul.mubr.bf16.gmra.mrb[0].mxu0 %v193
      %v305 = vpop.f32.mrb[0].mxu0
      %v306 = vadd.f32 %v157, %v305
      %v307 = vpop.f32.mrb[0].mxu0
      %v308 = vpop.f32.mrb[0].mxu0
      %v309 = vadd.f32 %v157, %v308
      %v310 = vpop.f32.mrb[0].mxu0
      %311 = vmatprep.mubr.bf16.mxu0 0
      %312 = vmatmul.mubr.bf16.gmra.mrb[0].mxu0 %v194
      %v313 = vpop.f32.mrb[0].mxu0
      %v314 = vadd.f32 %v157, %v313
      %v315 = vpop.f32.mrb[0].mxu0
      %v316 = vpop.f32.mrb[0].mxu0
      %v317 = vadd.f32 %v157, %v316
      %v318 = vpop.f32.mrb[0].mxu0
      %319 = vmatprep.mubr.bf16.mxu0 0
      %320 = vmatmul.mubr.bf16.gmra.mrb[0].mxu0 %v195
      %v321 = vpop.f32.mrb[0].mxu0
      %v322 = vadd.f32 %v157, %v321
      %v323 = vpop.f32.mrb[0].mxu0
      %v324 = vpop.f32.mrb[0].mxu0
      %v325 = vadd.f32 %v157, %v324
      %v326 = vpop.f32.mrb[0].mxu0
      %327 = vmatprep.mubr.bf16.mxu0 0
      %328 = vmatmul.mubr.bf16.gmra.mrb[0].mxu0 %v196
      %v329 = vpop.f32.mrb[0].mxu0
      %v330 = vadd.f32 %v157, %v329
      %v331 = vpop.f32.mrb[0].mxu0
      %v332 = vpop.f32.mrb[0].mxu0
      %v333 = vadd.f32 %v157, %v332
      %v334 = vpop.f32.mrb[0].mxu0
      %335 = vmatprep.mubr.bf16.mxu0 0
      %336 = vmatmul.mubr.bf16.gmra.mrb[0].mxu0 %v197
      %v337 = vpop.f32.mrb[0].mxu0
      %v338 = vadd.f32 %v157, %v337
      %v339 = vpop.f32.mrb[0].mxu0
      %v340 = vpop.f32.mrb[0].mxu0
      %v341 = vadd.f32 %v157, %v340
      %v342 = vpop.f32.mrb[0].mxu0
      %343 = vmatprep.mubr.bf16.mxu0 0
      %344 = vmatmul.mubr.bf16.gmra.mrb[0].mxu0 %v198
      %v345 = vpop.f32.mrb[0].mxu0
      %v346 = vadd.f32 %v157, %v345
      %v347 = vpop.f32.mrb[0].mxu0
      %v348 = vpop.f32.mrb[0].mxu0
      %v349 = vadd.f32 %v157, %v348
      %v350 = vpop.f32.mrb[0].mxu0
      %351 = vdwg.mxu0
      %v352 = vmul.f32 %v290, %v290
      %v353 = vmul.f32 %v293, %v293
      %v354 = vmul.f32 %v298, %v298
      %v355 = vmul.f32 %v301, %v301
      %v356 = vmul.f32 %v306, %v306
      %v357 = vmul.f32 %v309, %v309
      %v358 = vmul.f32 %v314, %v314
      %v359 = vmul.f32 %v317, %v317
      %v360 = vmul.f32 %v322, %v322
      %v361 = vmul.f32 %v325, %v325
      %v362 = vmul.f32 %v330, %v330
      %v363 = vmul.f32 %v333, %v333
      %v364 = vmul.f32 %v338, %v338
      %v365 = vmul.f32 %v341, %v341
      %v366 = vmul.f32 %v346, %v346
      %v367 = vmul.f32 %v349, %v349
      %v368 = vmul.f32 %v290, %v352
      %v369 = vmul.f32 %v293, %v353
      %v370 = vmul.f32 %v298, %v354
      %v371 = vmul.f32 %v301, %v355
      %v372 = vmul.f32 %v306, %v356
      %v373 = vmul.f32 %v309, %v357
      %v374 = vmul.f32 %v314, %v358
      %v375 = vmul.f32 %v317, %v359
      %v376 = vmul.f32 %v322, %v360
      %v377 = vmul.f32 %v325, %v361
      %v378 = vmul.f32 %v330, %v362
      %v379 = vmul.f32 %v333, %v363
      %v380 = vmul.f32 %v338, %v364
      %v381 = vmul.f32 %v341, %v365
      %v382 = vmul.f32 %v346, %v366
      %v383 = vmul.f32 %v349, %v367
      %v384 = vmul.f32 %v368, 0.044715
      %v385 = vmul.f32 %v369, 0.044715
      %v386 = vmul.f32 %v370, 0.044715
      %v387 = vmul.f32 %v371, 0.044715
      %v388 = vmul.f32 %v372, 0.044715
      %v389 = vmul.f32 %v373, 0.044715
      %v390 = vmul.f32 %v374, 0.044715
      %v391 = vmul.f32 %v375, 0.044715
      %v392 = vmul.f32 %v376, 0.044715
      %v393 = vmul.f32 %v377, 0.044715
      %v394 = vmul.f32 %v378, 0.044715
      %v395 = vmul.f32 %v379, 0.044715
      %v396 = vmul.f32 %v380, 0.044715
      %v397 = vmul.f32 %v381, 0.044715
      %v398 = vmul.f32 %v382, 0.044715
      %v399 = vmul.f32 %v383, 0.044715
      %v400 = vadd.f32 %v290, %v384
      %v401 = vadd.f32 %v293, %v385
      %v402 = vadd.f32 %v298, %v386
      %v403 = vadd.f32 %v301, %v387
      %v404 = vadd.f32 %v306, %v388
      %v405 = vadd.f32 %v309, %v389
      %v406 = vadd.f32 %v314, %v390
      %v407 = vadd.f32 %v317, %v391
      %v408 = vadd.f32 %v322, %v392
      %v409 = vadd.f32 %v325, %v393
      %v410 = vadd.f32 %v330, %v394
      %v411 = vadd.f32 %v333, %v395
      %v412 = vadd.f32 %v338, %v396
      %v413 = vadd.f32 %v341, %v397
      %v414 = vadd.f32 %v346, %v398
      %v415 = vadd.f32 %v349, %v399
      %v416 = vmul.f32 %v400, 0.7978846
      %v417 = vmul.f32 %v401, 0.7978846
      %v418 = vmul.f32 %v402, 0.7978846
      %v419 = vmul.f32 %v403, 0.7978846
      %v420 = vmul.f32 %v404, 0.7978846
      %v421 = vmul.f32 %v405, 0.7978846
      %v422 = vmul.f32 %v406, 0.7978846
      %v423 = vmul.f32 %v407, 0.7978846
      %v424 = vmul.f32 %v408, 0.7978846
      %v425 = vmul.f32 %v409, 0.7978846
      %v426 = vmul.f32 %v410, 0.7978846
      %v427 = vmul.f32 %v411, 0.7978846
      %v428 = vmul.f32 %v412, 0.7978846
      %v429 = vmul.f32 %v413, 0.7978846
      %v430 = vmul.f32 %v414, 0.7978846
      %v431 = vmul.f32 %v415, 0.7978846
      %v432 = vtanh.pop %v416
      %v433 = vtanh.pop %v417
      %v434 = vtanh.pop %v418
      %v435 = vtanh.pop %v419
      %v436 = vtanh.pop %v420
      %v437 = vtanh.pop %v421
      %v438 = vtanh.pop %v422
      %v439 = vtanh.pop %v423
      %v440 = vtanh.pop %v424
      %v441 = vtanh.pop %v425
      %v442 = vtanh.pop %v426
      %v443 = vtanh.pop %v427
      %v444 = vtanh.pop %v428
      %v445 = vtanh.pop %v429
      %v446 = vtanh.pop %v430
      %v447 = vtanh.pop %v431
      %v448 = vadd.f32 %v432, 1.0
      %v449 = vadd.f32 %v433, 1.0
      %v450 = vadd.f32 %v434, 1.0
      %v451 = vadd.f32 %v435, 1.0
      %v452 = vadd.f32 %v436, 1.0
      %v453 = vadd.f32 %v437, 1.0
      %v454 = vadd.f32 %v438, 1.0
      %v455 = vadd.f32 %v439, 1.0
      %v456 = vadd.f32 %v440, 1.0
      %v457 = vadd.f32 %v441, 1.0
      %v458 = vadd.f32 %v442, 1.0
      %v459 = vadd.f32 %v443, 1.0
      %v460 = vadd.f32 %v444, 1.0
      %v461 = vadd.f32 %v445, 1.0
      %v462 = vadd.f32 %v446, 1.0
      %v463 = vadd.f32 %v447, 1.0
      %v464 = vmul.f32 %v448, 0.5
      %v465 = vmul.f32 %v449, 0.5
      %v466 = vmul.f32 %v450, 0.5
      %v467 = vmul.f32 %v451, 0.5
      %v468 = vmul.f32 %v452, 0.5
      %v469 = vmul.f32 %v453, 0.5
      %v470 = vmul.f32 %v454, 0.5
      %v471 = vmul.f32 %v455, 0.5
      %v472 = vmul.f32 %v456, 0.5
      %v473 = vmul.f32 %v457, 0.5
      %v474 = vmul.f32 %v458, 0.5
      %v475 = vmul.f32 %v459, 0.5
      %v476 = vmul.f32 %v460, 0.5
      %v477 = vmul.f32 %v461, 0.5
      %v478 = vmul.f32 %v462, 0.5
      %v479 = vmul.f32 %v463, 0.5
      %v480 = vmul.f32 %v290, %v464
      %v481 = vmul.f32 %v293, %v465
      %v482 = vmul.f32 %v298, %v466
      %v483 = vmul.f32 %v301, %v467
      %v484 = vmul.f32 %v306, %v468
      %v485 = vmul.f32 %v309, %v469
      %v486 = vmul.f32 %v314, %v470
      %v487 = vmul.f32 %v317, %v471
      %v488 = vmul.f32 %v322, %v472
      %v489 = vmul.f32 %v325, %v473
      %v490 = vmul.f32 %v330, %v474
      %v491 = vmul.f32 %v333, %v475
      %v492 = vmul.f32 %v338, %v476
      %v493 = vmul.f32 %v341, %v477
      %v494 = vmul.f32 %v346, %v478
      %v495 = vmul.f32 %v349, %v479
      %v496 = vpack.c.bf16 %v481, %v480
      %v497 = vpack.c.bf16 %v483, %v482
      %v498 = vpack.c.bf16 %v485, %v484
      %v499 = vpack.c.bf16 %v487, %v486
      %v500 = vpack.c.bf16 %v489, %v488
      %v501 = vpack.c.bf16 %v491, %v490
      %v502 = vpack.c.bf16 %v493, %v492
      %v503 = vpack.c.bf16 %v495, %v494
      %504 = vst [vmem:[#allocation2] sm:$0xff] %v496
      %505 = vst [vmem:[#allocation2 + $0x8] sm:$0xff] %v497
      %506 = vst [vmem:[#allocation2 + $0x10] sm:$0xff] %v498
      %507 = vst [vmem:[#allocation2 + $0x18] sm:$0xff] %v499
      %508 = vst [vmem:[#allocation2 + $0x20] sm:$0xff] %v500
      %509 = vst [vmem:[#allocation2 + $0x28] sm:$0xff] %v501
      %510 = vst [vmem:[#allocation2 + $0x30] sm:$0xff] %v502
      %511 = vst [vmem:[#allocation2 + $0x38] sm:$0xff] %v503
      %v512 = vld [vmem:[#allocation10] sm:$0xf]
      %v513 = vld [vmem:[#allocation10 + $0x4] sm:$0xf]
      %v514 = vld [vmem:[#allocation10 + $0x8] sm:$0xf]
      %v515 = vld [vmem:[#allocation10 + $0xc] sm:$0xf]
      %v516 = vld [vmem:[#allocation10 + $0x10] sm:$0xf]
      %v517 = vld [vmem:[#allocation10 + $0x14] sm:$0xf]
      %v518 = vld [vmem:[#allocation10 + $0x18] sm:$0xf]
      %v519 = vld [vmem:[#allocation10 + $0x1c] sm:$0xf]
      %v520 = vld [vmem:[#allocation10 + $0x20] sm:$0xf]
      %v521 = vld [vmem:[#allocation10 + $0x24] sm:$0xf]
      %v522 = vld [vmem:[#allocation10 + $0x28] sm:$0xf]
      %v523 = vld [vmem:[#allocation10 + $0x2c] sm:$0xf]
      %v524 = vld [vmem:[#allocation10 + $0x30] sm:$0xf]
      %v525 = vld [vmem:[#allocation10 + $0x34] sm:$0xf]
      %v526 = vld [vmem:[#allocation10 + $0x38] sm:$0xf]
      %v527 = vld [vmem:[#allocation10 + $0x3c] sm:$0xf]
      %v528 = vld [vmem:[#allocation12] sm:$0xf]
      %v529 = vld [vmem:[#allocation12 + $0x4] sm:$0xf]
      %v530 = vld [vmem:[#allocation12 + $0x8] sm:$0xf]
      %v531 = vld [vmem:[#allocation12 + $0xc] sm:$0xf]
      %v532 = vld [vmem:[#allocation12 + $0x10] sm:$0xf]
      %v533 = vld [vmem:[#allocation12 + $0x14] sm:$0xf]
      %v534 = vld [vmem:[#allocation12 + $0x18] sm:$0xf]
      %v535 = vld [vmem:[#allocation12 + $0x1c] sm:$0xf]
      %v536 = vld [vmem:[#allocation12 + $0x20] sm:$0xf]
      %v537 = vld [vmem:[#allocation12 + $0x24] sm:$0xf]
      %v538 = vld [vmem:[#allocation12 + $0x28] sm:$0xf]
      %v539 = vld [vmem:[#allocation12 + $0x2c] sm:$0xf]
      %v540 = vld [vmem:[#allocation12 + $0x30] sm:$0xf]
      %v541 = vld [vmem:[#allocation12 + $0x34] sm:$0xf]
      %v542 = vld [vmem:[#allocation12 + $0x38] sm:$0xf]
      %v543 = vld [vmem:[#allocation12 + $0x3c] sm:$0xf]
      %v544 = vld [vmem:[%s6] sm:$0x1]
      %v546 = vlaneseq
      %v547 = vshrl.u32 %v546, 7
      %v548 = vsub.s32 0, %v547
      %v549 = vrot.slane %v544, %v548
      %v567 = vunpack.c.l.b16 %v512
      %v568 = vunpack.c.l.b16 %v513
      %v569 = vunpack.c.l.b16 %v514
      %v570 = vunpack.c.l.b16 %v515
      %v571 = vunpack.c.l.b16 %v516
      %v572 = vunpack.c.l.b16 %v517
      %v573 = vunpack.c.l.b16 %v518
      %v574 = vunpack.c.l.b16 %v519
      %v575 = vunpack.c.l.b16 %v520
      %v576 = vunpack.c.l.b16 %v521
      %v577 = vunpack.c.l.b16 %v522
      %v578 = vunpack.c.l.b16 %v523
      %v579 = vunpack.c.l.b16 %v524
      %v580 = vunpack.c.l.b16 %v525
      %v581 = vunpack.c.l.b16 %v526
      %v582 = vunpack.c.l.b16 %v527
      %v583 = vpack.c.b16 %v568, %v567
      %v584 = vpack.c.b16 %v570, %v569
      %v585 = vpack.c.b16 %v572, %v571
      %v586 = vpack.c.b16 %v574, %v573
      %v587 = vpack.c.b16 %v576, %v575
      %v588 = vpack.c.b16 %v578, %v577
      %v589 = vpack.c.b16 %v580, %v579
      %v590 = vpack.c.b16 %v582, %v581
      %v615 = vunpack.c.l.b16 %v528
      %v616 = vunpack.c.l.b16 %v529
      %v617 = vunpack.c.l.b16 %v530
      %v618 = vunpack.c.l.b16 %v531
      %v619 = vunpack.c.l.b16 %v532
      %v620 = vunpack.c.l.b16 %v533
      %v621 = vunpack.c.l.b16 %v534
      %v622 = vunpack.c.l.b16 %v535
      %v623 = vunpack.c.l.b16 %v536
      %v624 = vunpack.c.l.b16 %v537
      %v625 = vunpack.c.l.b16 %v538
      %v626 = vunpack.c.l.b16 %v539
      %v627 = vunpack.c.l.b16 %v540
      %v628 = vunpack.c.l.b16 %v541
      %v629 = vunpack.c.l.b16 %v542
      %v630 = vunpack.c.l.b16 %v543
      %v631 = vpack.c.b16 %v616, %v615
      %v632 = vpack.c.b16 %v618, %v617
      %v633 = vpack.c.b16 %v620, %v619
      %v634 = vpack.c.b16 %v622, %v621
      %v635 = vpack.c.b16 %v624, %v623
      %v636 = vpack.c.b16 %v626, %v625
      %v637 = vpack.c.b16 %v628, %v627
      %v638 = vpack.c.b16 %v630, %v629
      %647 = vmatprep.subr.bf16.mxu0 0
      %648 = vmatpush1.bf16.msra.mxu0 %v631
      %649 = vmatprep.subr.bf16.mxu0 0
      %650 = vmatpush1.bf16.msra.mxu0 %v632
      %651 = vmatprep.subr.bf16.mxu0 0
      %652 = vmatpush1.bf16.msra.mxu0 %v633
      %653 = vmatprep.subr.bf16.mxu0 0
      %654 = vmatpush1.bf16.msra.mxu0 %v634
      %655 = vmatprep.subr.bf16.mxu0 0
      %656 = vmatpush1.bf16.msra.mxu0 %v635
      %657 = vmatprep.subr.bf16.mxu0 0
      %658 = vmatpush1.bf16.msra.mxu0 %v636
      %659 = vmatprep.subr.bf16.mxu0 0
      %660 = vmatpush1.bf16.msra.mxu0 %v637
      %661 = vmatprep.subr.bf16.mxu0 0
      %662 = vmatpush1.bf16.msra.mxu0 %v638
      %663 = vmatprep.subr.bf16.mxu0 0
      %664 = vmatpush1.bf16.msra.mxu0 0
      %665 = vmatprep.subr.bf16.mxu0 0
      %666 = vmatpush1.bf16.msra.mxu0 0
      %667 = vmatprep.subr.bf16.mxu0 0
      %668 = vmatpush1.bf16.msra.mxu0 0
      %669 = vmatprep.subr.bf16.mxu0 0
      %670 = vmatpush1.bf16.msra.mxu0 0
      %671 = vmatprep.subr.bf16.mxu0 0
      %672 = vmatpush1.bf16.msra.mxu0 0
      %673 = vmatprep.subr.bf16.mxu0 0
      %674 = vmatpush1.bf16.msra.mxu0 0
      %675 = vmatprep.subr.bf16.mxu0 0
      %676 = vmatpush1.bf16.msra.mxu0 0
      %677 = vmatprep.subr.bf16.mxu0 0
      %678 = vmatpush1.bf16.msra.mxu0 0
      %679 = vmatprep.mubr.bf16.mxu0 0
      %680 = vmatmul.mubr.bf16.gmra.mrb[0].mxu0 %v583
      %v681 = vpop.f32.mrb[0].mxu0
      %v682 = vadd.f32 %v549, %v681
      %v683 = vpop.f32.mrb[0].mxu0
      %v684 = vpop.f32.mrb[0].mxu0
      %v685 = vadd.f32 %v549, %v684
      %v686 = vpop.f32.mrb[0].mxu0
      %687 = vmatprep.mubr.bf16.mxu0 0
      %688 = vmatmul.mubr.bf16.gmra.mrb[0].mxu0 %v584
      %v689 = vpop.f32.mrb[0].mxu0
      %v690 = vadd.f32 %v549, %v689
      %v691 = vpop.f32.mrb[0].mxu0
      %v692 = vpop.f32.mrb[0].mxu0
      %v693 = vadd.f32 %v549, %v692
      %v694 = vpop.f32.mrb[0].mxu0
      %695 = vmatprep.mubr.bf16.mxu0 0
      %696 = vmatmul.mubr.bf16.gmra.mrb[0].mxu0 %v585
      %v697 = vpop.f32.mrb[0].mxu0
      %v698 = vadd.f32 %v549, %v697
      %v699 = vpop.f32.mrb[0].mxu0
      %v700 = vpop.f32.mrb[0].mxu0
      %v701 = vadd.f32 %v549, %v700
      %v702 = vpop.f32.mrb[0].mxu0
      %703 = vmatprep.mubr.bf16.mxu0 0
      %704 = vmatmul.mubr.bf16.gmra.mrb[0].mxu0 %v586
      %v705 = vpop.f32.mrb[0].mxu0
      %v706 = vadd.f32 %v549, %v705
      %v707 = vpop.f32.mrb[0].mxu0
      %v708 = vpop.f32.mrb[0].mxu0
      %v709 = vadd.f32 %v549, %v708
      %v710 = vpop.f32.mrb[0].mxu0
      %711 = vmatprep.mubr.bf16.mxu0 0
      %712 = vmatmul.mubr.bf16.gmra.mrb[0].mxu0 %v587
      %v713 = vpop.f32.mrb[0].mxu0
      %v714 = vadd.f32 %v549, %v713
      %v715 = vpop.f32.mrb[0].mxu0
      %v716 = vpop.f32.mrb[0].mxu0
      %v717 = vadd.f32 %v549, %v716
      %v718 = vpop.f32.mrb[0].mxu0
      %719 = vmatprep.mubr.bf16.mxu0 0
      %720 = vmatmul.mubr.bf16.gmra.mrb[0].mxu0 %v588
      %v721 = vpop.f32.mrb[0].mxu0
      %v722 = vadd.f32 %v549, %v721
      %v723 = vpop.f32.mrb[0].mxu0
      %v724 = vpop.f32.mrb[0].mxu0
      %v725 = vadd.f32 %v549, %v724
      %v726 = vpop.f32.mrb[0].mxu0
      %727 = vmatprep.mubr.bf16.mxu0 0
      %728 = vmatmul.mubr.bf16.gmra.mrb[0].mxu0 %v589
      %v729 = vpop.f32.mrb[0].mxu0
      %v730 = vadd.f32 %v549, %v729
      %v731 = vpop.f32.mrb[0].mxu0
      %v732 = vpop.f32.mrb[0].mxu0
      %v733 = vadd.f32 %v549, %v732
      %v734 = vpop.f32.mrb[0].mxu0
      %735 = vmatprep.mubr.bf16.mxu0 0
      %736 = vmatmul.mubr.bf16.gmra.mrb[0].mxu0 %v590
      %v737 = vpop.f32.mrb[0].mxu0
      %v738 = vadd.f32 %v549, %v737
      %v739 = vpop.f32.mrb[0].mxu0
      %v740 = vpop.f32.mrb[0].mxu0
      %v741 = vadd.f32 %v549, %v740
      %v742 = vpop.f32.mrb[0].mxu0
      %743 = vdwg.mxu0
      %v744 = vmul.f32 %v682, %v682
      %v745 = vmul.f32 %v685, %v685
      %v746 = vmul.f32 %v690, %v690
      %v747 = vmul.f32 %v693, %v693
      %v748 = vmul.f32 %v698, %v698
      %v749 = vmul.f32 %v701, %v701
      %v750 = vmul.f32 %v706, %v706
      %v751 = vmul.f32 %v709, %v709
      %v752 = vmul.f32 %v714, %v714
      %v753 = vmul.f32 %v717, %v717
      %v754 = vmul.f32 %v722, %v722
      %v755 = vmul.f32 %v725, %v725
      %v756 = vmul.f32 %v730, %v730
      %v757 = vmul.f32 %v733, %v733
      %v758 = vmul.f32 %v738, %v738
      %v759 = vmul.f32 %v741, %v741
      %v760 = vmul.f32 %v682, %v744
      %v761 = vmul.f32 %v685, %v745
      %v762 = vmul.f32 %v690, %v746
      %v763 = vmul.f32 %v693, %v747
      %v764 = vmul.f32 %v698, %v748
      %v765 = vmul.f32 %v701, %v749
      %v766 = vmul.f32 %v706, %v750
      %v767 = vmul.f32 %v709, %v751
      %v768 = vmul.f32 %v714, %v752
      %v769 = vmul.f32 %v717, %v753
      %v770 = vmul.f32 %v722, %v754
      %v771 = vmul.f32 %v725, %v755
      %v772 = vmul.f32 %v730, %v756
      %v773 = vmul.f32 %v733, %v757
      %v774 = vmul.f32 %v738, %v758
      %v775 = vmul.f32 %v741, %v759
      %v776 = vmul.f32 %v760, 0.044715
      %v777 = vmul.f32 %v761, 0.044715
      %v778 = vmul.f32 %v762, 0.044715
      %v779 = vmul.f32 %v763, 0.044715
      %v780 = vmul.f32 %v764, 0.044715
      %v781 = vmul.f32 %v765, 0.044715
      %v782 = vmul.f32 %v766, 0.044715
      %v783 = vmul.f32 %v767, 0.044715
      %v784 = vmul.f32 %v768, 0.044715
      %v785 = vmul.f32 %v769, 0.044715
      %v786 = vmul.f32 %v770, 0.044715
      %v787 = vmul.f32 %v771, 0.044715
      %v788 = vmul.f32 %v772, 0.044715
      %v789 = vmul.f32 %v773, 0.044715
      %v790 = vmul.f32 %v774, 0.044715
      %v791 = vmul.f32 %v775, 0.044715
      %v792 = vadd.f32 %v682, %v776
      %v793 = vadd.f32 %v685, %v777
      %v794 = vadd.f32 %v690, %v778
      %v795 = vadd.f32 %v693, %v779
      %v796 = vadd.f32 %v698, %v780
      %v797 = vadd.f32 %v701, %v781
      %v798 = vadd.f32 %v706, %v782
      %v799 = vadd.f32 %v709, %v783
      %v800 = vadd.f32 %v714, %v784
      %v801 = vadd.f32 %v717, %v785
      %v802 = vadd.f32 %v722, %v786
      %v803 = vadd.f32 %v725, %v787
      %v804 = vadd.f32 %v730, %v788
      %v805 = vadd.f32 %v733, %v789
      %v806 = vadd.f32 %v738, %v790
      %v807 = vadd.f32 %v741, %v791
      %v808 = vmul.f32 %v792, 0.7978846
      %v809 = vmul.f32 %v793, 0.7978846
      %v810 = vmul.f32 %v794, 0.7978846
      %v811 = vmul.f32 %v795, 0.7978846
      %v812 = vmul.f32 %v796, 0.7978846
      %v813 = vmul.f32 %v797, 0.7978846
      %v814 = vmul.f32 %v798, 0.7978846
      %v815 = vmul.f32 %v799, 0.7978846
      %v816 = vmul.f32 %v800, 0.7978846
      %v817 = vmul.f32 %v801, 0.7978846
      %v818 = vmul.f32 %v802, 0.7978846
      %v819 = vmul.f32 %v803, 0.7978846
      %v820 = vmul.f32 %v804, 0.7978846
      %v821 = vmul.f32 %v805, 0.7978846
      %v822 = vmul.f32 %v806, 0.7978846
      %v823 = vmul.f32 %v807, 0.7978846
      %v824 = vtanh.pop %v808
      %v825 = vtanh.pop %v809
      %v826 = vtanh.pop %v810
      %v827 = vtanh.pop %v811
      %v828 = vtanh.pop %v812
      %v829 = vtanh.pop %v813
      %v830 = vtanh.pop %v814
      %v831 = vtanh.pop %v815
      %v832 = vtanh.pop %v816
      %v833 = vtanh.pop %v817
      %v834 = vtanh.pop %v818
      %v835 = vtanh.pop %v819
      %v836 = vtanh.pop %v820
      %v837 = vtanh.pop %v821
      %v838 = vtanh.pop %v822
      %v839 = vtanh.pop %v823
      %v840 = vadd.f32 %v824, 1.0
      %v841 = vadd.f32 %v825, 1.0
      %v842 = vadd.f32 %v826, 1.0
      %v843 = vadd.f32 %v827, 1.0
      %v844 = vadd.f32 %v828, 1.0
      %v845 = vadd.f32 %v829, 1.0
      %v846 = vadd.f32 %v830, 1.0
      %v847 = vadd.f32 %v831, 1.0
      %v848 = vadd.f32 %v832, 1.0
      %v849 = vadd.f32 %v833, 1.0
      %v850 = vadd.f32 %v834, 1.0
      %v851 = vadd.f32 %v835, 1.0
      %v852 = vadd.f32 %v836, 1.0
      %v853 = vadd.f32 %v837, 1.0
      %v854 = vadd.f32 %v838, 1.0
      %v855 = vadd.f32 %v839, 1.0
      %v856 = vmul.f32 %v840, 0.5
      %v857 = vmul.f32 %v841, 0.5
      %v858 = vmul.f32 %v842, 0.5
      %v859 = vmul.f32 %v843, 0.5
      %v860 = vmul.f32 %v844, 0.5
      %v861 = vmul.f32 %v845, 0.5
      %v862 = vmul.f32 %v846, 0.5
      %v863 = vmul.f32 %v847, 0.5
      %v864 = vmul.f32 %v848, 0.5
      %v865 = vmul.f32 %v849, 0.5
      %v866 = vmul.f32 %v850, 0.5
      %v867 = vmul.f32 %v851, 0.5
      %v868 = vmul.f32 %v852, 0.5
      %v869 = vmul.f32 %v853, 0.5
      %v870 = vmul.f32 %v854, 0.5
      %v871 = vmul.f32 %v855, 0.5
      %v872 = vmul.f32 %v682, %v856
      %v873 = vmul.f32 %v685, %v857
      %v874 = vmul.f32 %v690, %v858
      %v875 = vmul.f32 %v693, %v859
      %v876 = vmul.f32 %v698, %v860
      %v877 = vmul.f32 %v701, %v861
      %v878 = vmul.f32 %v706, %v862
      %v879 = vmul.f32 %v709, %v863
      %v880 = vmul.f32 %v714, %v864
      %v881 = vmul.f32 %v717, %v865
      %v882 = vmul.f32 %v722, %v866
      %v883 = vmul.f32 %v725, %v867
      %v884 = vmul.f32 %v730, %v868
      %v885 = vmul.f32 %v733, %v869
      %v886 = vmul.f32 %v738, %v870
      %v887 = vmul.f32 %v741, %v871
      %v888 = vpack.c.bf16 %v873, %v872
      %v889 = vpack.c.bf16 %v875, %v874
      %v890 = vpack.c.bf16 %v877, %v876
      %v891 = vpack.c.bf16 %v879, %v878
      %v892 = vpack.c.bf16 %v881, %v880
      %v893 = vpack.c.bf16 %v883, %v882
      %v894 = vpack.c.bf16 %v885, %v884
      %v895 = vpack.c.bf16 %v887, %v886
      %896 = vst [vmem:[#allocation3] sm:$0xff] %v888
      %897 = vst [vmem:[#allocation3 + $0x8] sm:$0xff] %v889
      %898 = vst [vmem:[#allocation3 + $0x10] sm:$0xff] %v890
      %899 = vst [vmem:[#allocation3 + $0x18] sm:$0xff] %v891
      %900 = vst [vmem:[#allocation3 + $0x20] sm:$0xff] %v892
      %901 = vst [vmem:[#allocation3 + $0x28] sm:$0xff] %v893
      %902 = vst [vmem:[#allocation3 + $0x30] sm:$0xff] %v894
      %903 = vst [vmem:[#allocation3 + $0x38] sm:$0xff] %v895
    $region61: #{tpu_custom_call.1} parent=1 // pred_fallthru
      _
    %v904 = vld [vmem:[#allocation2] sm:$0xff]
    %v905 = vld [vmem:[#allocation2 + $0x8] sm:$0xff]
    %v906 = vld [vmem:[#allocation2 + $0x10] sm:$0xff]
    %v907 = vld [vmem:[#allocation2 + $0x18] sm:$0xff]
    %v908 = vld [vmem:[#allocation2 + $0x20] sm:$0xff]
    %v909 = vld [vmem:[#allocation2 + $0x28] sm:$0xff]
    %v910 = vld [vmem:[#allocation2 + $0x30] sm:$0xff]
    %v911 = vld [vmem:[#allocation2 + $0x38] sm:$0xff]
    %v912 = vld [vmem:[#allocation9] sm:$0xf]
    %v913 = vld [vmem:[#allocation9 + $0x4] sm:$0xf]
    %v914 = vld [vmem:[#allocation9 + $0x8] sm:$0xf]
    %v915 = vld [vmem:[#allocation9 + $0xc] sm:$0xf]
    %v916 = vld [vmem:[#allocation9 + $0x10] sm:$0xf]
    %v917 = vld [vmem:[#allocation9 + $0x14] sm:$0xf]
    %v918 = vld [vmem:[#allocation9 + $0x18] sm:$0xf]
    %v919 = vld [vmem:[#allocation9 + $0x1c] sm:$0xf]
    %v920 = vld [vmem:[#allocation9 + $0x20] sm:$0xf]
    %v921 = vld [vmem:[#allocation9 + $0x24] sm:$0xf]
    %v922 = vld [vmem:[#allocation9 + $0x28] sm:$0xf]
    %v923 = vld [vmem:[#allocation9 + $0x2c] sm:$0xf]
    %v924 = vld [vmem:[#allocation9 + $0x30] sm:$0xf]
    %v925 = vld [vmem:[#allocation9 + $0x34] sm:$0xf]
    %v926 = vld [vmem:[#allocation9 + $0x38] sm:$0xf]
    %v927 = vld [vmem:[#allocation9 + $0x3c] sm:$0xf]
    %v944 = vunpack.c.l.b16 %v912
    %v945 = vunpack.c.l.b16 %v913
    %v946 = vunpack.c.l.b16 %v914
    %v947 = vunpack.c.l.b16 %v915
    %v948 = vunpack.c.l.b16 %v916
    %v949 = vunpack.c.l.b16 %v917
    %v950 = vunpack.c.l.b16 %v918
    %v951 = vunpack.c.l.b16 %v919
    %v952 = vunpack.c.l.b16 %v920
    %v953 = vunpack.c.l.b16 %v921
    %v954 = vunpack.c.l.b16 %v922
    %v955 = vunpack.c.l.b16 %v923
    %v956 = vunpack.c.l.b16 %v924
    %v957 = vunpack.c.l.b16 %v925
    %v958 = vunpack.c.l.b16 %v926
    %v959 = vunpack.c.l.b16 %v927
    %v960 = vpack.c.b16 %v945, %v944
    %v961 = vpack.c.b16 %v947, %v946
    %v962 = vpack.c.b16 %v949, %v948
    %v963 = vpack.c.b16 %v951, %v950
    %v964 = vpack.c.b16 %v953, %v952
    %v965 = vpack.c.b16 %v955, %v954
    %v966 = vpack.c.b16 %v957, %v956
    %v967 = vpack.c.b16 %v959, %v958
    %976 = vmatprep.subr.bf16.mxu0 0
    %977 = vmatpush1.bf16.msra.mxu0 %v960
    %978 = vmatprep.subr.bf16.mxu0 0
    %979 = vmatpush1.bf16.msra.mxu0 %v961
    %980 = vmatprep.subr.bf16.mxu0 0
    %981 = vmatpush1.bf16.msra.mxu0 %v962
    %982 = vmatprep.subr.bf16.mxu0 0
    %983 = vmatpush1.bf16.msra.mxu0 %v963
    %984 = vmatprep.subr.bf16.mxu0 0
    %985 = vmatpush1.bf16.msra.mxu0 %v964
    %986 = vmatprep.subr.bf16.mxu0 0
    %987 = vmatpush1.bf16.msra.mxu0 %v965
    %988 = vmatprep.subr.bf16.mxu0 0
    %989 = vmatpush1.bf16.msra.mxu0 %v966
    %990 = vmatprep.subr.bf16.mxu0 0
    %991 = vmatpush1.bf16.msra.mxu0 %v967
    %992 = vmatprep.subr.bf16.mxu0 0
    %993 = vmatpush1.bf16.msra.mxu0 0
    %994 = vmatprep.subr.bf16.mxu0 0
    %995 = vmatpush1.bf16.msra.mxu0 0
    %996 = vmatprep.subr.bf16.mxu0 0
    %997 = vmatpush1.bf16.msra.mxu0 0
    %998 = vmatprep.subr.bf16.mxu0 0
    %999 = vmatpush1.bf16.msra.mxu0 0
    %1000 = vmatprep.subr.bf16.mxu0 0
    %1001 = vmatpush1.bf16.msra.mxu0 0
    %1002 = vmatprep.subr.bf16.mxu0 0
    %1003 = vmatpush1.bf16.msra.mxu0 0
    %1004 = vmatprep.subr.bf16.mxu0 0
    %1005 = vmatpush1.bf16.msra.mxu0 0
    %1006 = vmatprep.subr.bf16.mxu0 0
    %1007 = vmatpush1.bf16.msra.mxu0 0
    %1008 = vmatprep.mubr.bf16.mxu0 0
    %1009 = vmatmul.mubr.bf16.gmra.mrb[0].mxu0 %v904
    %v1010 = vpop.f32.mrb[0].mxu0
    %v1011 = vadd.f32 0.0, %v1010
    %v1012 = vpop.f32.mrb[0].mxu0
    %v1013 = vpop.f32.mrb[0].mxu0
    %v1014 = vadd.f32 0.0, %v1013
    %v1015 = vpop.f32.mrb[0].mxu0
    %1016 = vmatprep.mubr.bf16.mxu0 0
    %1017 = vmatmul.mubr.bf16.gmra.mrb[0].mxu0 %v905
    %v1018 = vpop.f32.mrb[0].mxu0
    %v1019 = vadd.f32 0.0, %v1018
    %v1020 = vpop.f32.mrb[0].mxu0
    %v1021 = vpop.f32.mrb[0].mxu0
    %v1022 = vadd.f32 0.0, %v1021
    %v1023 = vpop.f32.mrb[0].mxu0
    %1024 = vmatprep.mubr.bf16.mxu0 0
    %1025 = vmatmul.mubr.bf16.gmra.mrb[0].mxu0 %v906
    %v1026 = vpop.f32.mrb[0].mxu0
    %v1027 = vadd.f32 0.0, %v1026
    %v1028 = vpop.f32.mrb[0].mxu0
    %v1029 = vpop.f32.mrb[0].mxu0
    %v1030 = vadd.f32 0.0, %v1029
    %v1031 = vpop.f32.mrb[0].mxu0
    %1032 = vmatprep.mubr.bf16.mxu0 0
    %1033 = vmatmul.mubr.bf16.gmra.mrb[0].mxu0 %v907
    %v1034 = vpop.f32.mrb[0].mxu0
    %v1035 = vadd.f32 0.0, %v1034
    %v1036 = vpop.f32.mrb[0].mxu0
    %v1037 = vpop.f32.mrb[0].mxu0
    %v1038 = vadd.f32 0.0, %v1037
    %v1039 = vpop.f32.mrb[0].mxu0
    %1040 = vmatprep.mubr.bf16.mxu0 0
    %1041 = vmatmul.mubr.bf16.gmra.mrb[0].mxu0 %v908
    %v1042 = vpop.f32.mrb[0].mxu0
    %v1043 = vadd.f32 0.0, %v1042
    %v1044 = vpop.f32.mrb[0].mxu0
    %v1045 = vpop.f32.mrb[0].mxu0
    %v1046 = vadd.f32 0.0, %v1045
    %v1047 = vpop.f32.mrb[0].mxu0
    %1048 = vmatprep.mubr.bf16.mxu0 0
    %1049 = vmatmul.mubr.bf16.gmra.mrb[0].mxu0 %v909
    %v1050 = vpop.f32.mrb[0].mxu0
    %v1051 = vadd.f32 0.0, %v1050
    %v1052 = vpop.f32.mrb[0].mxu0
    %v1053 = vpop.f32.mrb[0].mxu0
    %v1054 = vadd.f32 0.0, %v1053
    %v1055 = vpop.f32.mrb[0].mxu0
    %1056 = vmatprep.mubr.bf16.mxu0 0
    %1057 = vmatmul.mubr.bf16.gmra.mrb[0].mxu0 %v910
    %v1058 = vpop.f32.mrb[0].mxu0
    %v1059 = vadd.f32 0.0, %v1058
    %v1060 = vpop.f32.mrb[0].mxu0
    %v1061 = vpop.f32.mrb[0].mxu0
    %v1062 = vadd.f32 0.0, %v1061
    %v1063 = vpop.f32.mrb[0].mxu0
    %1064 = vmatprep.mubr.bf16.mxu0 0
    %1065 = vmatmul.mubr.bf16.gmra.mrb[0].mxu0 %v911
    %v1066 = vpop.f32.mrb[0].mxu0
    %v1067 = vadd.f32 0.0, %v1066
    %v1068 = vpop.f32.mrb[0].mxu0
    %v1069 = vpop.f32.mrb[0].mxu0
    %v1070 = vadd.f32 0.0, %v1069
    %v1071 = vpop.f32.mrb[0].mxu0
    %1072 = vdwg.mxu0
    %1073 = vst [vmem:[#allocation15] sm:$0xff] %v1011
    %1074 = vst [vmem:[#allocation15 + $0x8] sm:$0xff] %v1014
    %1075 = vst [vmem:[#allocation15 + $0x10] sm:$0xff] %v1019
    %1076 = vst [vmem:[#allocation15 + $0x18] sm:$0xff] %v1022
    %1077 = vst [vmem:[#allocation15 + $0x20] sm:$0xff] %v1027
    %1078 = vst [vmem:[#allocation15 + $0x28] sm:$0xff] %v1030
    %1079 = vst [vmem:[#allocation15 + $0x30] sm:$0xff] %v1035
    %1080 = vst [vmem:[#allocation15 + $0x38] sm:$0xff] %v1038
    %1081 = vst [vmem:[#allocation15 + $0x40] sm:$0xff] %v1043
    %1082 = vst [vmem:[#allocation15 + $0x48] sm:$0xff] %v1046
    %1083 = vst [vmem:[#allocation15 + $0x50] sm:$0xff] %v1051
    %1084 = vst [vmem:[#allocation15 + $0x58] sm:$0xff] %v1054
    %1085 = vst [vmem:[#allocation15 + $0x60] sm:$0xff] %v1059
    %1086 = vst [vmem:[#allocation15 + $0x68] sm:$0xff] %v1062
    %1087 = vst [vmem:[#allocation15 + $0x70] sm:$0xff] %v1067
    %1088 = vst [vmem:[#allocation15 + $0x78] sm:$0xff] %v1070
    %v1089 = vld [vmem:[#allocation3] sm:$0xff]
    %v1090 = vld [vmem:[#allocation3 + $0x8] sm:$0xff]
    %v1091 = vld [vmem:[#allocation3 + $0x10] sm:$0xff]
    %v1092 = vld [vmem:[#allocation3 + $0x18] sm:$0xff]
    %v1093 = vld [vmem:[#allocation3 + $0x20] sm:$0xff]
    %v1094 = vld [vmem:[#allocation3 + $0x28] sm:$0xff]
    %v1095 = vld [vmem:[#allocation3 + $0x30] sm:$0xff]
    %v1096 = vld [vmem:[#allocation3 + $0x38] sm:$0xff]
    %v1097 = vld [vmem:[#allocation13] sm:$0xf]
    %v1098 = vld [vmem:[#allocation13 + $0x4] sm:$0xf]
    %v1099 = vld [vmem:[#allocation13 + $0x8] sm:$0xf]
    %v1100 = vld [vmem:[#allocation13 + $0xc] sm:$0xf]
    %v1101 = vld [vmem:[#allocation13 + $0x10] sm:$0xf]
    %v1102 = vld [vmem:[#allocation13 + $0x14] sm:$0xf]
    %v1103 = vld [vmem:[#allocation13 + $0x18] sm:$0xf]
    %v1104 = vld [vmem:[#allocation13 + $0x1c] sm:$0xf]
    %v1105 = vld [vmem:[#allocation13 + $0x20] sm:$0xf]
    %v1106 = vld [vmem:[#allocation13 + $0x24] sm:$0xf]
    %v1107 = vld [vmem:[#allocation13 + $0x28] sm:$0xf]
    %v1108 = vld [vmem:[#allocation13 + $0x2c] sm:$0xf]
    %v1109 = vld [vmem:[#allocation13 + $0x30] sm:$0xf]
    %v1110 = vld [vmem:[#allocation13 + $0x34] sm:$0xf]
    %v1111 = vld [vmem:[#allocation13 + $0x38] sm:$0xf]
    %v1112 = vld [vmem:[#allocation13 + $0x3c] sm:$0xf]
    %v1129 = vunpack.c.l.b16 %v1097
    %v1130 = vunpack.c.l.b16 %v1098
    %v1131 = vunpack.c.l.b16 %v1099
    %v1132 = vunpack.c.l.b16 %v1100
    %v1133 = vunpack.c.l.b16 %v1101
    %v1134 = vunpack.c.l.b16 %v1102
    %v1135 = vunpack.c.l.b16 %v1103
    %v1136 = vunpack.c.l.b16 %v1104
    %v1137 = vunpack.c.l.b16 %v1105
    %v1138 = vunpack.c.l.b16 %v1106
    %v1139 = vunpack.c.l.b16 %v1107
    %v1140 = vunpack.c.l.b16 %v1108
    %v1141 = vunpack.c.l.b16 %v1109
    %v1142 = vunpack.c.l.b16 %v1110
    %v1143 = vunpack.c.l.b16 %v1111
    %v1144 = vunpack.c.l.b16 %v1112
    %v1145 = vpack.c.b16 %v1130, %v1129
    %v1146 = vpack.c.b16 %v1132, %v1131
    %v1147 = vpack.c.b16 %v1134, %v1133
    %v1148 = vpack.c.b16 %v1136, %v1135
    %v1149 = vpack.c.b16 %v1138, %v1137
    %v1150 = vpack.c.b16 %v1140, %v1139
    %v1151 = vpack.c.b16 %v1142, %v1141
    %v1152 = vpack.c.b16 %v1144, %v1143
    %1161 = vmatprep.subr.bf16.mxu0 0
    %1162 = vmatpush1.bf16.msra.mxu0 %v1145
    %1163 = vmatprep.subr.bf16.mxu0 0
    %1164 = vmatpush1.bf16.msra.mxu0 %v1146
    %1165 = vmatprep.subr.bf16.mxu0 0
    %1166 = vmatpush1.bf16.msra.mxu0 %v1147
    %1167 = vmatprep.subr.bf16.mxu0 0
    %1168 = vmatpush1.bf16.msra.mxu0 %v1148
    %1169 = vmatprep.subr.bf16.mxu0 0
    %1170 = vmatpush1.bf16.msra.mxu0 %v1149
    %1171 = vmatprep.subr.bf16.mxu0 0
    %1172 = vmatpush1.bf16.msra.mxu0 %v1150
    %1173 = vmatprep.subr.bf16.mxu0 0
    %1174 = vmatpush1.bf16.msra.mxu0 %v1151
    %1175 = vmatprep.subr.bf16.mxu0 0
    %1176 = vmatpush1.bf16.msra.mxu0 %v1152
    %1177 = vmatprep.subr.bf16.mxu0 0
    %1178 = vmatpush1.bf16.msra.mxu0 0
    %1179 = vmatprep.subr.bf16.mxu0 0
    %1180 = vmatpush1.bf16.msra.mxu0 0
    %1181 = vmatprep.subr.bf16.mxu0 0
    %1182 = vmatpush1.bf16.msra.mxu0 0
    %1183 = vmatprep.subr.bf16.mxu0 0
    %1184 = vmatpush1.bf16.msra.mxu0 0
    %1185 = vmatprep.subr.bf16.mxu0 0
    %1186 = vmatpush1.bf16.msra.mxu0 0
    %1187 = vmatprep.subr.bf16.mxu0 0
    %1188 = vmatpush1.bf16.msra.mxu0 0
    %1189 = vmatprep.subr.bf16.mxu0 0
    %1190 = vmatpush1.bf16.msra.mxu0 0
    %1191 = vmatprep.subr.bf16.mxu0 0
    %1192 = vmatpush1.bf16.msra.mxu0 0
    %1193 = vmatprep.mubr.bf16.mxu0 0
    %1194 = vmatmul.mubr.bf16.gmra.mrb[0].mxu0 %v1089
    %v1195 = vpop.f32.mrb[0].mxu0
    %v1196 = vadd.f32 0.0, %v1195
    %v1197 = vpop.f32.mrb[0].mxu0
    %v1198 = vpop.f32.mrb[0].mxu0
    %v1199 = vadd.f32 0.0, %v1198
    %v1200 = vpop.f32.mrb[0].mxu0
    %1201 = vmatprep.mubr.bf16.mxu0 0
    %1202 = vmatmul.mubr.bf16.gmra.mrb[0].mxu0 %v1090
    %v1203 = vpop.f32.mrb[0].mxu0
    %v1204 = vadd.f32 0.0, %v1203
    %v1205 = vpop.f32.mrb[0].mxu0
    %v1206 = vpop.f32.mrb[0].mxu0
    %v1207 = vadd.f32 0.0, %v1206
    %v1208 = vpop.f32.mrb[0].mxu0
    %1209 = vmatprep.mubr.bf16.mxu0 0
    %1210 = vmatmul.mubr.bf16.gmra.mrb[0].mxu0 %v1091
    %v1211 = vpop.f32.mrb[0].mxu0
    %v1212 = vadd.f32 0.0, %v1211
    %v1213 = vpop.f32.mrb[0].mxu0
    %v1214 = vpop.f32.mrb[0].mxu0
    %v1215 = vadd.f32 0.0, %v1214
    %v1216 = vpop.f32.mrb[0].mxu0
    %1217 = vmatprep.mubr.bf16.mxu0 0
    %1218 = vmatmul.mubr.bf16.gmra.mrb[0].mxu0 %v1092
    %v1219 = vpop.f32.mrb[0].mxu0
    %v1220 = vadd.f32 0.0, %v1219
    %v1221 = vpop.f32.mrb[0].mxu0
    %v1222 = vpop.f32.mrb[0].mxu0
    %v1223 = vadd.f32 0.0, %v1222
    %v1224 = vpop.f32.mrb[0].mxu0
    %1225 = vmatprep.mubr.bf16.mxu0 0
    %1226 = vmatmul.mubr.bf16.gmra.mrb[0].mxu0 %v1093
    %v1227 = vpop.f32.mrb[0].mxu0
    %v1228 = vadd.f32 0.0, %v1227
    %v1229 = vpop.f32.mrb[0].mxu0
    %v1230 = vpop.f32.mrb[0].mxu0
    %v1231 = vadd.f32 0.0, %v1230
    %v1232 = vpop.f32.mrb[0].mxu0
    %1233 = vmatprep.mubr.bf16.mxu0 0
    %1234 = vmatmul.mubr.bf16.gmra.mrb[0].mxu0 %v1094
    %v1235 = vpop.f32.mrb[0].mxu0
    %v1236 = vadd.f32 0.0, %v1235
    %v1237 = vpop.f32.mrb[0].mxu0
    %v1238 = vpop.f32.mrb[0].mxu0
    %v1239 = vadd.f32 0.0, %v1238
    %v1240 = vpop.f32.mrb[0].mxu0
    %1241 = vmatprep.mubr.bf16.mxu0 0
    %1242 = vmatmul.mubr.bf16.gmra.mrb[0].mxu0 %v1095
    %v1243 = vpop.f32.mrb[0].mxu0
    %v1244 = vadd.f32 0.0, %v1243
    %v1245 = vpop.f32.mrb[0].mxu0
    %v1246 = vpop.f32.mrb[0].mxu0
    %v1247 = vadd.f32 0.0, %v1246
    %v1248 = vpop.f32.mrb[0].mxu0
    %1249 = vmatprep.mubr.bf16.mxu0 0
    %1250 = vmatmul.mubr.bf16.gmra.mrb[0].mxu0 %v1096
    %v1251 = vpop.f32.mrb[0].mxu0
    %v1252 = vadd.f32 0.0, %v1251
    %v1253 = vpop.f32.mrb[0].mxu0
    %v1254 = vpop.f32.mrb[0].mxu0
    %v1255 = vadd.f32 0.0, %v1254
    %v1256 = vpop.f32.mrb[0].mxu0
    %1257 = vdwg.mxu0
    %1258 = vst [vmem:[#allocation16] sm:$0xff] %v1196
    %1259 = vst [vmem:[#allocation16 + $0x8] sm:$0xff] %v1199
    %1260 = vst [vmem:[#allocation16 + $0x10] sm:$0xff] %v1204
    %1261 = vst [vmem:[#allocation16 + $0x18] sm:$0xff] %v1207
    %1262 = vst [vmem:[#allocation16 + $0x20] sm:$0xff] %v1212
    %1263 = vst [vmem:[#allocation16 + $0x28] sm:$0xff] %v1215
    %1264 = vst [vmem:[#allocation16 + $0x30] sm:$0xff] %v1220
    %1265 = vst [vmem:[#allocation16 + $0x38] sm:$0xff] %v1223
    %1266 = vst [vmem:[#allocation16 + $0x40] sm:$0xff] %v1228
    %1267 = vst [vmem:[#allocation16 + $0x48] sm:$0xff] %v1231
    %1268 = vst [vmem:[#allocation16 + $0x50] sm:$0xff] %v1236
    %1269 = vst [vmem:[#allocation16 + $0x58] sm:$0xff] %v1239
    %1270 = vst [vmem:[#allocation16 + $0x60] sm:$0xff] %v1244
    %1271 = vst [vmem:[#allocation16 + $0x68] sm:$0xff] %v1247
    %1272 = vst [vmem:[#allocation16 + $0x70] sm:$0xff] %v1252
    %1273 = vst [vmem:[#allocation16 + $0x78] sm:$0xff] %v1255
    // Predicated region
    $region62: #{tpu_custom_call.1} parent=1 // pred_check
      _
    $region63: #{tpu_custom_call.1} parent=1 // pred_check_branch
      %1275 = sbr.rel (0) target = $region65
    $region64: #{tpu_custom_call.1} parent=1 // pred_region
      %s1277 = ssub.s32 2048, 2048
      %1278 = vsyncadd [#allocation6], %s1277
      %s1279 = sshll.u32 [#allocation15], 4
      %s1280 = int_to_ptr.vmem [resolvable:$true] %s1279
      %1285 = dma.vmem_to_hbm [thread:$0]  %s1280, 2048, %s8, [#allocation6], 128, 128, 8
    $region65: #{tpu_custom_call.1} parent=1 // pred_fallthru
      _
    // Predicated region
    $region66: #{tpu_custom_call.1} parent=1 // pred_check
      _
    $region67: #{tpu_custom_call.1} parent=1 // pred_check_branch
      %1287 = sbr.rel (0) target = $region69
    $region68: #{tpu_custom_call.1} parent=1 // pred_region
      %s1289 = ssub.s32 2048, 2048
      %1290 = vsyncadd [#allocation17], %s1289
      %s1291 = sshll.u32 [#allocation16], 4
      %s1292 = int_to_ptr.vmem [resolvable:$true] %s1291
      %1297 = dma.vmem_to_hbm [thread:$0]  %s1292, 2048, %s9, [#allocation17], 128, 128, 8
    $region69: #{tpu_custom_call.1} parent=1 // pred_fallthru
      _
    // Predicated region
    $region70: #{tpu_custom_call.1} parent=1 // pred_check
      _
    $region71: #{tpu_custom_call.1} parent=1 // pred_check_branch
      %1299 = sbr.rel (0) target = $region73
    $region72: #{tpu_custom_call.1} parent=1 // pred_region
      %1300 = dma.done [#allocation6], 2048
    $region73: #{tpu_custom_call.1} parent=1 // pred_fallthru
      _
    // Predicated region
    $region74: #{tpu_custom_call.1} parent=1 // pred_check
      _
    $region75: #{tpu_custom_call.1} parent=1 // pred_check_branch
      %1302 = sbr.rel (0) target = $region77
    $region76: #{tpu_custom_call.1} parent=1 // pred_region
      %1303 = dma.done [#allocation17], 2048
    $region77: #{tpu_custom_call.1} parent=1 // pred_fallthru
      _
    %1304 = vsyncpa [#allocation5], 1
    %1305 = vsyncpa [#allocation8], 1
    %1306 = vsyncpa [#allocation11], 1
    %1307 = vsyncpa [#allocation14], 1
    %1308 = vsyncpa [#allocation6], 1
    %1309 = vsyncpa [#allocation17], 1

</llo_original>
